<compile_context>
chip_gen: v7x
topology: tpu7x:2x2x1
jax: 0.10.0
libtpu: 0.0.40
codegen_flags: <defaults>
</compile_context>

<pallas_src>
import functools

import jax
import jax.numpy as jnp
from jax.experimental import pallas as pl
from jax.experimental.pallas import tpu as pltpu

_LANE = 128  # TPU lane width
_SUBLANE = 8  # f32 sublane count


def _round_up(x, m):
    return ((x + m - 1) // m) * m


def _critic_kernel(x_ref, w1_ref, b1_ref, w2_ref, b2_ref, w3_ref, b3_ref, o_ref):
    # One batch tile per grid step; weights/biases are whole-array resident blocks.
    x = x_ref[...]
    l1 = jnp.dot(x, w1_ref[...], preferred_element_type=jnp.float32) + b1_ref[...]
    l1 = jnp.maximum(l1, 0.0)
    l2 = jnp.dot(l1, w2_ref[...], preferred_element_type=jnp.float32) + b2_ref[...]
    l2 = jnp.maximum(l2, 0.0)
    out = jnp.dot(l2, w3_ref[...], preferred_element_type=jnp.float32) + b3_ref[...]
    o_ref[...] = out.astype(o_ref.dtype)  # lane-dense (TB, 128) unmasked store


@functools.partial(jax.jit, static_argnames=("block_batch",))
def critic_forward(x, w1, b1, w2, b2, w3, b3, *, block_batch=512):
    batch, in_features = x.shape
    h1 = w1.shape[1]
    h2 = w2.shape[1]
    out_size = w3.shape[1]

    # --- Lane-dense output: pad final layer to a multiple of 128 output lanes. ---
    out_pad = _round_up(max(out_size, _LANE), _LANE)
    if out_pad != out_size:
        w3p = jnp.zeros((h2, out_pad), w3.dtype).at[:, :out_size].set(w3)
        b3p = jnp.zeros((1, out_pad), b3.dtype).at[:, :out_size].set(b3)
    else:
        w3p, b3p = w3, b3

    # --- Batch tiling: TB multiple of 8 (f32 sublane), capped at block_batch. ---
    tb = min(block_batch, _round_up(batch, _SUBLANE))
    padded_batch = _round_up(batch, tb)
    if padded_batch != batch:
        x = jnp.pad(x, ((0, padded_batch - batch), (0, 0)))
    grid = (padded_batch // tb,)

    # Advisory cost hint for XLA scheduling around the custom call.
    flops = 2 * padded_batch * (in_features * h1 + h1 * h2 + h2 * out_pad)
    bytes_accessed = 4 * (
        padded_batch * in_features
        + in_features * h1 + h1
        + h1 * h2 + h2
        + h2 * out_pad + out_pad
        + padded_batch * out_pad
    )
    cost = pl.CostEstimate(flops=flops, transcendentals=0, bytes_accessed=bytes_accessed)

    resident = lambda a: pl.BlockSpec(a.shape, lambda i: (0,) * a.ndim)

    out_padded = pl.pallas_call(
        _critic_kernel,
        out_shape=jax.ShapeDtypeStruct((padded_batch, out_pad), jnp.float32),
        grid=grid,
        in_specs=[
            pl.BlockSpec((tb, in_features), lambda i: (i, 0)),  # x: tiled over batch
            resident(w1), resident(b1),                         # weights stay in VMEM
            resident(w2), resident(b2),
            resident(w3p), resident(b3p),
        ],
        out_specs=pl.BlockSpec((tb, out_pad), lambda i: (i, 0)),
        compiler_params=pltpu.CompilerParams(
            dimension_semantics=("parallel",),  # shard batch tiles across TCs (v7x megacore)
        ),
        cost_estimate=cost,
    )(x, w1, b1, w2, b2, w3p, b3p)

    # Slice away batch padding and the lane padding of the scalar value head.
    return out_padded[:batch, :out_size]


def init_params(key, input_size, output_size, hidden_units):
    """Deterministic init mimicking PyTorch nn.Linear default (uniform +-1/sqrt(fan_in)).
    Weights are returned already transposed to (in, out) layout for the kernel."""
    sizes = [(input_size, hidden_units[0]),
             (hidden_units[0], hidden_units[1]),
             (hidden_units[1], output_size)]
    params = []
    for (fan_in, fan_out) in sizes:
        key, kw, kb = jax.random.split(key, 3)
        bound = 1.0 / (fan_in ** 0.5)
        w = jax.random.uniform(kw, (fan_in, fan_out), jnp.float32, -bound, bound)
        b = jax.random.uniform(kb, (1, fan_out), jnp.float32, -bound, bound)
        params.extend([w, b])
    return params


def reference_forward(x, w1, b1, w2, b2, w3, b3):
    l1 = jnp.maximum(x @ w1 + b1, 0.0)
    l2 = jnp.maximum(l1 @ w2 + b2, 0.0)
    return l2 @ w3 + b3


if __name__ == "__main__":
    # Small shapes consistent with the module's forward: state vector -> scalar value.
    batch = 8
    input_size = 8
    hidden_units = (32, 32)
    output_size = 1

    key = jax.random.PRNGKey(0)
    key, kx = jax.random.split(key)
    x = jax.random.normal(kx, (batch, input_size), jnp.float32)

    w1, b1, w2, b2, w3, b3 = init_params(key, input_size, output_size, hidden_units)

    # Small demo batch (overhead-bound by nature; the grid only amortizes at large batch).
    out = critic_forward(x, w1, b1, w2, b2, w3, b3)
    out = jax.block_until_ready(out)
    ref = reference_forward(x, w1, b1, w2, b2, w3, b3)
    assert out.shape == (batch, output_size)
    assert jnp.allclose(out, ref, atol=1e-5, rtol=1e-5)

    # Larger, non-multiple-of-tile batch to exercise batch tiling + padding path.
    key, kx2 = jax.random.split(key)
    x_big = jax.random.normal(kx2, (1030, input_size), jnp.float32)
    out_big = jax.block_until_ready(critic_forward(x_big, w1, b1, w2, b2, w3, b3))
    ref_big = reference_forward(x_big, w1, b1, w2, b2, w3, b3)
    assert out_big.shape == (1030, output_size)
    assert jnp.allclose(out_big, ref_big, atol=1e-5, rtol=1e-5)

    print("KERNEL_OK")
</pallas_src>

<mosaic_0001>
module attributes {stable_mosaic.version = 11 : i64} {
  func.func @_critic_kernel(%arg0: i32, %arg1: memref<8x8xf32, #tpu.memory_space<vmem>>, %arg2: memref<8x32xf32, #tpu.memory_space<vmem>>, %arg3: memref<1x32xf32, #tpu.memory_space<vmem>>, %arg4: memref<32x32xf32, #tpu.memory_space<vmem>>, %arg5: memref<1x32xf32, #tpu.memory_space<vmem>>, %arg6: memref<32x128xf32, #tpu.memory_space<vmem>>, %arg7: memref<1x128xf32, #tpu.memory_space<vmem>>, %arg8: memref<8x128xf32, #tpu.memory_space<vmem>>) attributes {dimension_semantics = [#tpu.dimension_semantics<parallel>], iteration_bounds = array<i64: 1>, scalar_prefetch = 0 : i64, scratch_operands = 0 : i64, tpu.core_type = #tpu.core_type<tc>, window_params = [{transform_indices = @transform_0, window_bounds = array<i64: 8, 8>}, {pipeline_mode = #tpu.pipeline_mode<synchronous>, transform_indices = @transform_1, window_bounds = array<i64: 8, 32>}, {pipeline_mode = #tpu.pipeline_mode<synchronous>, transform_indices = @transform_2, window_bounds = array<i64: 1, 32>}, {pipeline_mode = #tpu.pipeline_mode<synchronous>, transform_indices = @transform_3, window_bounds = array<i64: 32, 32>}, {pipeline_mode = #tpu.pipeline_mode<synchronous>, transform_indices = @transform_4, window_bounds = array<i64: 1, 32>}, {pipeline_mode = #tpu.pipeline_mode<synchronous>, transform_indices = @transform_5, window_bounds = array<i64: 32, 128>}, {pipeline_mode = #tpu.pipeline_mode<synchronous>, transform_indices = @transform_6, window_bounds = array<i64: 1, 128>}, {transform_indices = @transform_7, window_bounds = array<i64: 8, 128>}]} {
    %c0 = arith.constant 0 : index
    %c0_0 = arith.constant 0 : index
    %0 = vector.load %arg1[%c0, %c0_0] : memref<8x8xf32, #tpu.memory_space<vmem>>, vector<8x8xf32>
    %c0_1 = arith.constant 0 : index
    %c0_2 = arith.constant 0 : index
    %1 = vector.load %arg2[%c0_1, %c0_2] : memref<8x32xf32, #tpu.memory_space<vmem>>, vector<8x32xf32>
    %cst = arith.constant dense<0.000000e+00> : vector<8x32xf32>
    %2 = tpu.matmul %0, %1, %cst {dimension_numbers = #tpu.dot_dimension_numbers<[1], [0], [0], [1], [0, 0, 1, 1], [], []>} : vector<8x8xf32>, vector<8x32xf32>, vector<8x32xf32> -> vector<8x32xf32>
    %c0_3 = arith.constant 0 : index
    %c0_4 = arith.constant 0 : index
    %3 = vector.load %arg3[%c0_3, %c0_4] : memref<1x32xf32, #tpu.memory_space<vmem>>, vector<1x32xf32>
    %4 = vector.broadcast %3 : vector<1x32xf32> to vector<8x32xf32>
    %5 = arith.addf %2, %4 : vector<8x32xf32>
    %cst_5 = arith.constant 0.000000e+00 : f32
    %6 = vector.broadcast %cst_5 : f32 to vector<8x32xf32>
    %7 = arith.maximumf %5, %6 : vector<8x32xf32>
    %c0_6 = arith.constant 0 : index
    %c0_7 = arith.constant 0 : index
    %8 = vector.load %arg4[%c0_6, %c0_7] : memref<32x32xf32, #tpu.memory_space<vmem>>, vector<32x32xf32>
    %cst_8 = arith.constant dense<0.000000e+00> : vector<8x32xf32>
    %9 = tpu.matmul %7, %8, %cst_8 {dimension_numbers = #tpu.dot_dimension_numbers<[1], [0], [0], [1], [0, 0, 1, 1], [], []>} : vector<8x32xf32>, vector<32x32xf32>, vector<8x32xf32> -> vector<8x32xf32>
    %c0_9 = arith.constant 0 : index
    %c0_10 = arith.constant 0 : index
    %10 = vector.load %arg5[%c0_9, %c0_10] : memref<1x32xf32, #tpu.memory_space<vmem>>, vector<1x32xf32>
    %11 = vector.broadcast %10 : vector<1x32xf32> to vector<8x32xf32>
    %12 = arith.addf %9, %11 : vector<8x32xf32>
    %cst_11 = arith.constant 0.000000e+00 : f32
    %13 = vector.broadcast %cst_11 : f32 to vector<8x32xf32>
    %14 = arith.maximumf %12, %13 : vector<8x32xf32>
    %c0_12 = arith.constant 0 : index
    %c0_13 = arith.constant 0 : index
    %15 = vector.load %arg6[%c0_12, %c0_13] : memref<32x128xf32, #tpu.memory_space<vmem>>, vector<32x128xf32>
    %cst_14 = arith.constant dense<0.000000e+00> : vector<8x128xf32>
    %16 = tpu.matmul %14, %15, %cst_14 {dimension_numbers = #tpu.dot_dimension_numbers<[1], [0], [0], [1], [0, 0, 1, 1], [], []>} : vector<8x32xf32>, vector<32x128xf32>, vector<8x128xf32> -> vector<8x128xf32>
    %c0_15 = arith.constant 0 : index
    %c0_16 = arith.constant 0 : index
    %17 = vector.load %arg7[%c0_15, %c0_16] : memref<1x128xf32, #tpu.memory_space<vmem>>, vector<1x128xf32>
    %18 = vector.broadcast %17 : vector<1x128xf32> to vector<8x128xf32>
    %19 = arith.addf %16, %18 : vector<8x128xf32>
    %c0_17 = arith.constant 0 : index
    %c0_18 = arith.constant 0 : index
    %20 = vector.load %arg8[%c0_17, %c0_18] : memref<8x128xf32, #tpu.memory_space<vmem>>, vector<8x128xf32>
    tpu.vector_store %arg8[%c0_17, %c0_18], %19 {strides = array<i32>} : memref<8x128xf32, #tpu.memory_space<vmem>>, vector<8x128xf32>,
    return
  }
  func.func @transform_0(%arg0: i32) -> (i32, i32) {
    %c0_i32 = arith.constant 0 : i32
    %c0_i32_0 = arith.constant 0 : i32
    return %arg0, %c0_i32 : i32, i32
  }
  func.func @transform_1(%arg0: i32) -> (i32, i32) {
    %c0_i32 = arith.constant 0 : i32
    %c0_i32_0 = arith.constant 0 : i32
    %c0_i32_1 = arith.constant 0 : i32
    return %c0_i32, %c0_i32_0 : i32, i32
  }
  func.func @transform_2(%arg0: i32) -> (i32, i32) {
    %c0_i32 = arith.constant 0 : i32
    %c0_i32_0 = arith.constant 0 : i32
    %c0_i32_1 = arith.constant 0 : i32
    return %c0_i32, %c0_i32_0 : i32, i32
  }
  func.func @transform_3(%arg0: i32) -> (i32, i32) {
    %c0_i32 = arith.constant 0 : i32
    %c0_i32_0 = arith.constant 0 : i32
    %c0_i32_1 = arith.constant 0 : i32
    return %c0_i32, %c0_i32_0 : i32, i32
  }
  func.func @transform_4(%arg0: i32) -> (i32, i32) {
    %c0_i32 = arith.constant 0 : i32
    %c0_i32_0 = arith.constant 0 : i32
    %c0_i32_1 = arith.constant 0 : i32
    return %c0_i32, %c0_i32_0 : i32, i32
  }
  func.func @transform_5(%arg0: i32) -> (i32, i32) {
    %c0_i32 = arith.constant 0 : i32
    %c0_i32_0 = arith.constant 0 : i32
    %c0_i32_1 = arith.constant 0 : i32
    return %c0_i32, %c0_i32_0 : i32, i32
  }
  func.func @transform_6(%arg0: i32) -> (i32, i32) {
    %c0_i32 = arith.constant 0 : i32
    %c0_i32_0 = arith.constant 0 : i32
    %c0_i32_1 = arith.constant 0 : i32
    return %c0_i32, %c0_i32_0 : i32, i32
  }
  func.func @transform_7(%arg0: i32) -> (i32, i32) {
    %c0_i32 = arith.constant 0 : i32
    %c0_i32_0 = arith.constant 0 : i32
    return %arg0, %c0_i32 : i32, i32
  }
}

</mosaic_0001>

<llo_original>
// kernel: critic_forward.1
$region0: #{critic_forward.1}
  #allocation0 [shape = 'u32[]', space=smem, size = 0x4, offset = 0x4, fixed_abs, tag = 'smem constant byte address 0x4 - core index']
  #allocation1 [shape = 'u32[144,128]{1,0:T(1,128)}', space=vmem, size = 0x12000, scoped, tag = 'internal scratch']
  %s0 = inlined_call_operand.vmem [shape: f32[8,8], index: 0, kind: input, shape index: {}]
  %s1 = inlined_call_operand.vmem [shape: f32[8,32], index: 1, kind: input, shape index: {}]
  %s2 = inlined_call_operand.vmem [shape: f32[1,32], index: 2, kind: input, shape index: {}]
  %s3 = inlined_call_operand.vmem [shape: f32[32,32], index: 3, kind: input, shape index: {}]
  %s4 = inlined_call_operand.vmem [shape: f32[1,32], index: 4, kind: input, shape index: {}]
  %s5 = inlined_call_operand.vmem [shape: f32[32,128], index: 5, kind: input, shape index: {}]
  %s6 = inlined_call_operand.vmem [shape: f32[1,128], index: 6, kind: input, shape index: {}]
  %s7 = inlined_call_operand.vmem [shape: f32[8,128], index: 7, kind: output, shape index: {}]
  %s8 = sld [smem:[#allocation0]]
  $region38: #{critic_forward.1} parent=0
    _
  %s10 = ssub.s32 1, %s8
  %s11 = scalar_select 0, %s10, %s8
  // Predicated region
  $region2: #{critic_forward.1} parent=0 // pred_check
    _
  $region3: #{critic_forward.1} parent=0 // pred_check_branch
    %13 = sbr.rel (0) target = $region5
  $region4: #{critic_forward.1} parent=0 // pred_region
    _
  $region5: #{critic_forward.1} parent=0 // pred_fallthru
    _
  // Predicated region
  $region6: #{critic_forward.1} parent=0 // pred_check
    _
  $region7: #{critic_forward.1} parent=0 // pred_check_branch
    %15 = sbr.rel (0) target = $region9
  $region8: #{critic_forward.1} parent=0 // pred_region
    _
  $region9: #{critic_forward.1} parent=0 // pred_fallthru
    _
  // Predicated region
  $region10: #{critic_forward.1} parent=0 // pred_check
    _
  $region11: #{critic_forward.1} parent=0 // pred_check_branch
    %17 = sbr.rel (0) target = $region13
  $region12: #{critic_forward.1} parent=0 // pred_region
    _
  $region13: #{critic_forward.1} parent=0 // pred_fallthru
    _
  // Predicated region
  $region14: #{critic_forward.1} parent=0 // pred_check
    _
  $region15: #{critic_forward.1} parent=0 // pred_check_branch
    %19 = sbr.rel (0) target = $region17
  $region16: #{critic_forward.1} parent=0 // pred_region
    _
  $region17: #{critic_forward.1} parent=0 // pred_fallthru
    _
  // Predicated region
  $region18: #{critic_forward.1} parent=0 // pred_check
    _
  $region19: #{critic_forward.1} parent=0 // pred_check_branch
    %21 = sbr.rel (0) target = $region21
  $region20: #{critic_forward.1} parent=0 // pred_region
    _
  $region21: #{critic_forward.1} parent=0 // pred_fallthru
    _
  // Predicated region
  $region22: #{critic_forward.1} parent=0 // pred_check
    _
  $region23: #{critic_forward.1} parent=0 // pred_check_branch
    %23 = sbr.rel (0) target = $region25
  $region24: #{critic_forward.1} parent=0 // pred_region
    _
  $region25: #{critic_forward.1} parent=0 // pred_fallthru
    _
  // Predicated region
  $region26: #{critic_forward.1} parent=0 // pred_check
    _
  $region27: #{critic_forward.1} parent=0 // pred_check_branch
    %25 = sbr.rel (0) target = $region29
  $region28: #{critic_forward.1} parent=0 // pred_region
    _
  $region29: #{critic_forward.1} parent=0 // pred_fallthru
    _
  %v26 = vld [vmem:[%s0] sm:$0xff]
  %v27 = vld [vmem:[%s1] sm:$0xff]
  %v28 = vld [vmem:[%s2] sm:$0x1]
  %v30 = vlaneseq
  %v31 = vshrl.u32 %v30, 7
  %v32 = vsub.s32 0, %v31
  %v33 = vrot.slane %v28, %v32
  %vm35 = vcmask 64512
  %v37 = vsel %vm35, %v26, 0
  %39 = vmatprep.subr.mxu0 0.0
  %40 = vmatpush1.msra.mxu0 %v27
  %41 = vmatprep.subr.mxu0 0.0
  %42 = vmatpush1.msra.mxu0 0.0
  %43 = vmatprep.subr.mxu0 0.0
  %44 = vmatpush1.msra.mxu0 0.0
  %45 = vmatprep.subr.mxu0 0.0
  %46 = vmatpush1.msra.mxu0 0.0
  %47 = vmatprep.subr.mxu0 0.0
  %48 = vmatpush1.msra.mxu0 0.0
  %49 = vmatprep.subr.mxu0 0.0
  %50 = vmatpush1.msra.mxu0 0.0
  %51 = vmatprep.subr.mxu0 0.0
  %52 = vmatpush1.msra.mxu0 0.0
  %53 = vmatprep.subr.mxu0 0.0
  %54 = vmatpush1.msra.mxu0 0.0
  %55 = vmatprep.subr.mxu0 0.0
  %56 = vmatpush1.msra.mxu0 0.0
  %57 = vmatprep.subr.mxu0 0.0
  %58 = vmatpush1.msra.mxu0 0.0
  %59 = vmatprep.subr.mxu0 0.0
  %60 = vmatpush1.msra.mxu0 0.0
  %61 = vmatprep.subr.mxu0 0.0
  %62 = vmatpush1.msra.mxu0 0.0
  %63 = vmatprep.subr.mxu0 0.0
  %64 = vmatpush1.msra.mxu0 0.0
  %65 = vmatprep.subr.mxu0 0.0
  %66 = vmatpush1.msra.mxu0 0.0
  %67 = vmatprep.subr.mxu0 0.0
  %68 = vmatpush1.msra.mxu0 0.0
  %69 = vmatprep.subr.mxu0 0.0
  %70 = vmatpush1.msra.mxu0 0.0
  %71 = vmatprep.subr.mxu0 0.0
  %72 = vmatpush1.msra.mxu0 0.0
  %73 = vmatprep.subr.mxu0 0.0
  %74 = vmatpush1.msra.mxu0 0.0
  %75 = vmatprep.subr.mxu0 0.0
  %76 = vmatpush1.msra.mxu0 0.0
  %77 = vmatprep.subr.mxu0 0.0
  %78 = vmatpush1.msra.mxu0 0.0
  %79 = vmatprep.subr.mxu0 0.0
  %80 = vmatpush1.msra.mxu0 0.0
  %81 = vmatprep.subr.mxu0 0.0
  %82 = vmatpush1.msra.mxu0 0.0
  %83 = vmatprep.subr.mxu0 0.0
  %84 = vmatpush1.msra.mxu0 0.0
  %85 = vmatprep.subr.mxu0 0.0
  %86 = vmatpush1.msra.mxu0 0.0
  %87 = vmatprep.subr.mxu0 0.0
  %88 = vmatpush1.msra.mxu0 0.0
  %89 = vmatprep.subr.mxu0 0.0
  %90 = vmatpush1.msra.mxu0 0.0
  %91 = vmatprep.subr.mxu0 0.0
  %92 = vmatpush1.msra.mxu0 0.0
  %93 = vmatprep.subr.mxu0 0.0
  %94 = vmatpush1.msra.mxu0 0.0
  %95 = vmatprep.subr.mxu0 0.0
  %96 = vmatpush1.msra.mxu0 0.0
  %97 = vmatprep.subr.mxu0 0.0
  %98 = vmatpush1.msra.mxu0 0.0
  %99 = vmatprep.subr.mxu0 0.0
  %100 = vmatpush1.msra.mxu0 0.0
  %101 = vmatprep.subr.mxu0 0.0
  %102 = vmatpush1.msra.mxu0 0.0
  %103 = vmatprep.mubr.f32.mxu0 0.0
  %104 = vmatmul.mubr.f32.gmra.mrb[0].mxu0 %v37
  %v105 = vpop.f32.mrb[0].mxu0
  %v106 = vadd.f32 %v33, %v105
  %v107 = vpop.f32.mrb[0].mxu0
  %108 = vdwg.mxu0
  %v109 = vmax.f32 %v106, 0.0
  %v110 = vld [vmem:[%s3] sm:$0xff]
  %v111 = vld [vmem:[%s3 + $0x8] sm:$0xff]
  %v112 = vld [vmem:[%s3 + $0x10] sm:$0xff]
  %v113 = vld [vmem:[%s3 + $0x18] sm:$0xff]
  %v114 = vld [vmem:[%s4] sm:$0x1]
  %v116 = vlaneseq
  %v117 = vshrl.u32 %v116, 7
  %v118 = vsub.s32 0, %v117
  %v119 = vrot.slane %v114, %v118
  %vm121 = vcmask 261120
  %v123 = vsel %vm121, %v109, 0
  %125 = vmatprep.subr.mxu0 0.0
  %126 = vmatpush1.msra.mxu0 %v110
  %127 = vmatprep.subr.mxu0 0.0
  %128 = vmatpush1.msra.mxu0 %v111
  %129 = vmatprep.subr.mxu0 0.0
  %130 = vmatpush1.msra.mxu0 %v112
  %131 = vmatprep.subr.mxu0 0.0
  %132 = vmatpush1.msra.mxu0 %v113
  %133 = vmatprep.subr.mxu0 0.0
  %134 = vmatpush1.msra.mxu0 0.0
  %135 = vmatprep.subr.mxu0 0.0
  %136 = vmatpush1.msra.mxu0 0.0
  %137 = vmatprep.subr.mxu0 0.0
  %138 = vmatpush1.msra.mxu0 0.0
  %139 = vmatprep.subr.mxu0 0.0
  %140 = vmatpush1.msra.mxu0 0.0
  %141 = vmatprep.subr.mxu0 0.0
  %142 = vmatpush1.msra.mxu0 0.0
  %143 = vmatprep.subr.mxu0 0.0
  %144 = vmatpush1.msra.mxu0 0.0
  %145 = vmatprep.subr.mxu0 0.0
  %146 = vmatpush1.msra.mxu0 0.0
  %147 = vmatprep.subr.mxu0 0.0
  %148 = vmatpush1.msra.mxu0 0.0
  %149 = vmatprep.subr.mxu0 0.0
  %150 = vmatpush1.msra.mxu0 0.0
  %151 = vmatprep.subr.mxu0 0.0
  %152 = vmatpush1.msra.mxu0 0.0
  %153 = vmatprep.subr.mxu0 0.0
  %154 = vmatpush1.msra.mxu0 0.0
  %155 = vmatprep.subr.mxu0 0.0
  %156 = vmatpush1.msra.mxu0 0.0
  %157 = vmatprep.subr.mxu0 0.0
  %158 = vmatpush1.msra.mxu0 0.0
  %159 = vmatprep.subr.mxu0 0.0
  %160 = vmatpush1.msra.mxu0 0.0
  %161 = vmatprep.subr.mxu0 0.0
  %162 = vmatpush1.msra.mxu0 0.0
  %163 = vmatprep.subr.mxu0 0.0
  %164 = vmatpush1.msra.mxu0 0.0
  %165 = vmatprep.subr.mxu0 0.0
  %166 = vmatpush1.msra.mxu0 0.0
  %167 = vmatprep.subr.mxu0 0.0
  %168 = vmatpush1.msra.mxu0 0.0
  %169 = vmatprep.subr.mxu0 0.0
  %170 = vmatpush1.msra.mxu0 0.0
  %171 = vmatprep.subr.mxu0 0.0
  %172 = vmatpush1.msra.mxu0 0.0
  %173 = vmatprep.subr.mxu0 0.0
  %174 = vmatpush1.msra.mxu0 0.0
  %175 = vmatprep.subr.mxu0 0.0
  %176 = vmatpush1.msra.mxu0 0.0
  %177 = vmatprep.subr.mxu0 0.0
  %178 = vmatpush1.msra.mxu0 0.0
  %179 = vmatprep.subr.mxu0 0.0
  %180 = vmatpush1.msra.mxu0 0.0
  %181 = vmatprep.subr.mxu0 0.0
  %182 = vmatpush1.msra.mxu0 0.0
  %183 = vmatprep.subr.mxu0 0.0
  %184 = vmatpush1.msra.mxu0 0.0
  %185 = vmatprep.subr.mxu0 0.0
  %186 = vmatpush1.msra.mxu0 0.0
  %187 = vmatprep.subr.mxu0 0.0
  %188 = vmatpush1.msra.mxu0 0.0
  %189 = vmatprep.mubr.f32.mxu0 0.0
  %190 = vmatmul.mubr.f32.gmra.mrb[0].mxu0 %v123
  %v191 = vpop.f32.mrb[0].mxu0
  %v192 = vadd.f32 %v119, %v191
  %v193 = vpop.f32.mrb[0].mxu0
  %194 = vdwg.mxu0
  %v195 = vmax.f32 %v192, 0.0
  %v196 = vld [vmem:[%s5] sm:$0xff]
  %v197 = vld [vmem:[%s5 + $0x8] sm:$0xff]
  %v198 = vld [vmem:[%s5 + $0x10] sm:$0xff]
  %v199 = vld [vmem:[%s5 + $0x18] sm:$0xff]
  %v200 = vld [vmem:[%s6] sm:$0x1]
  %v202 = vlaneseq
  %v203 = vshrl.u32 %v202, 7
  %v204 = vsub.s32 0, %v203
  %v205 = vrot.slane %v200, %v204
  %v208 = vsel %vm121, %v195, 0
  %210 = vmatprep.subr.mxu0 0.0
  %211 = vmatpush1.msra.mxu0 %v196
  %212 = vmatprep.subr.mxu0 0.0
  %213 = vmatpush1.msra.mxu0 %v197
  %214 = vmatprep.subr.mxu0 0.0
  %215 = vmatpush1.msra.mxu0 %v198
  %216 = vmatprep.subr.mxu0 0.0
  %217 = vmatpush1.msra.mxu0 %v199
  %218 = vmatprep.subr.mxu0 0.0
  %219 = vmatpush1.msra.mxu0 0.0
  %220 = vmatprep.subr.mxu0 0.0
  %221 = vmatpush1.msra.mxu0 0.0
  %222 = vmatprep.subr.mxu0 0.0
  %223 = vmatpush1.msra.mxu0 0.0
  %224 = vmatprep.subr.mxu0 0.0
  %225 = vmatpush1.msra.mxu0 0.0
  %226 = vmatprep.subr.mxu0 0.0
  %227 = vmatpush1.msra.mxu0 0.0
  %228 = vmatprep.subr.mxu0 0.0
  %229 = vmatpush1.msra.mxu0 0.0
  %230 = vmatprep.subr.mxu0 0.0
  %231 = vmatpush1.msra.mxu0 0.0
  %232 = vmatprep.subr.mxu0 0.0
  %233 = vmatpush1.msra.mxu0 0.0
  %234 = vmatprep.subr.mxu0 0.0
  %235 = vmatpush1.msra.mxu0 0.0
  %236 = vmatprep.subr.mxu0 0.0
  %237 = vmatpush1.msra.mxu0 0.0
  %238 = vmatprep.subr.mxu0 0.0
  %239 = vmatpush1.msra.mxu0 0.0
  %240 = vmatprep.subr.mxu0 0.0
  %241 = vmatpush1.msra.mxu0 0.0
  %242 = vmatprep.subr.mxu0 0.0
  %243 = vmatpush1.msra.mxu0 0.0
  %244 = vmatprep.subr.mxu0 0.0
  %245 = vmatpush1.msra.mxu0 0.0
  %246 = vmatprep.subr.mxu0 0.0
  %247 = vmatpush1.msra.mxu0 0.0
  %248 = vmatprep.subr.mxu0 0.0
  %249 = vmatpush1.msra.mxu0 0.0
  %250 = vmatprep.subr.mxu0 0.0
  %251 = vmatpush1.msra.mxu0 0.0
  %252 = vmatprep.subr.mxu0 0.0
  %253 = vmatpush1.msra.mxu0 0.0
  %254 = vmatprep.subr.mxu0 0.0
  %255 = vmatpush1.msra.mxu0 0.0
  %256 = vmatprep.subr.mxu0 0.0
  %257 = vmatpush1.msra.mxu0 0.0
  %258 = vmatprep.subr.mxu0 0.0
  %259 = vmatpush1.msra.mxu0 0.0
  %260 = vmatprep.subr.mxu0 0.0
  %261 = vmatpush1.msra.mxu0 0.0
  %262 = vmatprep.subr.mxu0 0.0
  %263 = vmatpush1.msra.mxu0 0.0
  %264 = vmatprep.subr.mxu0 0.0
  %265 = vmatpush1.msra.mxu0 0.0
  %266 = vmatprep.subr.mxu0 0.0
  %267 = vmatpush1.msra.mxu0 0.0
  %268 = vmatprep.subr.mxu0 0.0
  %269 = vmatpush1.msra.mxu0 0.0
  %270 = vmatprep.subr.mxu0 0.0
  %271 = vmatpush1.msra.mxu0 0.0
  %272 = vmatprep.subr.mxu0 0.0
  %273 = vmatpush1.msra.mxu0 0.0
  %274 = vmatprep.mubr.f32.mxu0 0.0
  %275 = vmatmul.mubr.f32.gmra.mrb[0].mxu0 %v208
  %v276 = vpop.f32.mrb[0].mxu0
  %v277 = vadd.f32 %v205, %v276
  %v278 = vpop.f32.mrb[0].mxu0
  %279 = vdwg.mxu0
  %280 = vst [vmem:[%s7] sm:$0xff] %v277
  // Predicated region
  $region30: #{critic_forward.1} parent=0 // pred_check
    _
  $region31: #{critic_forward.1} parent=0 // pred_check_branch
    %282 = sbr.rel (0) target = $region33
  $region32: #{critic_forward.1} parent=0 // pred_region
    _
  $region33: #{critic_forward.1} parent=0 // pred_fallthru
    _
  // Predicated region
  $region34: #{critic_forward.1} parent=0 // pred_check
    _
  $region35: #{critic_forward.1} parent=0 // pred_check_branch
    %284 = sbr.rel (0) target = $region37
  $region36: #{critic_forward.1} parent=0 // pred_region
    _
  $region37: #{critic_forward.1} parent=0 // pred_fallthru
    _

</llo_original>
